<compile_context>
chip_gen: v7x
topology: tpu7x:2x2x1
jax: 0.10.0
libtpu: 0.0.40
codegen_flags: <defaults>
</compile_context>

<pallas_src>
import jax
import jax.numpy as jnp
from jax import lax
from jax.experimental import pallas as pl
from jax.experimental.pallas import tpu as pltpu


# ----------------------------- Pallas kernel ---------------------------------

def _lowrank_kernel(mask_ref, x_ref, vt_t_ref, ue_t_ref, o_ref):
    # mask_ref: (1, R)     f32      rank keep-mask (resident)
    # x_ref:    (tm, IN)   x.dtype  current M tile (cast to bf16 in-kernel)
    # vt_t_ref: (IN, R)    bf16     V_t^T, static (resident)
    # ue_t_ref: (R, OUT)   bf16     (U*E)^T, static (resident)
    # o_ref:    (tm, OUT)  x.dtype
    x_bf = x_ref[...].astype(jnp.bfloat16)
    y1 = jnp.dot(x_bf, vt_t_ref[...],
                 preferred_element_type=jnp.float32)            # (tm, R)   MXU
    y1 = y1 * mask_ref[...]                                     # (tm, R)   VPU (broadcast)
    out = jnp.dot(y1.astype(jnp.bfloat16), ue_t_ref[...],
                  preferred_element_type=jnp.float32)           # (tm, OUT) MXU
    o_ref[...] = out.astype(o_ref.dtype)


def _round_up(x, m):
    return ((x + m - 1) // m) * m


def _choose_tile_m(M, block_m):
    """16-row-aligned M tile; splits moderate M so v7x's 2 TCs both get a tile."""
    if M >= 2 * block_m:
        return block_m
    half = _round_up(pl.cdiv(M, 2), 16)
    return half if half < M else _round_up(M, 16)


def lowrank_linear_forward(x, vt_t_bf16, ue_t_bf16, mask, *, block_m=1024):
    """x: (B,S,IN); vt_t_bf16: (IN,R); ue_t_bf16: (R,OUT); mask: (R,) -> (B,S,OUT)."""
    B, S, IN = x.shape
    IN2, R = vt_t_bf16.shape
    R2, OUT = ue_t_bf16.shape
    assert IN == IN2 and R == R2

    M = B * S
    x2 = x.reshape(M, IN)                                  # view-only reshape
    mask2 = mask.astype(jnp.float32).reshape(1, R)         # tiny (1,R) VMEM input

    tm = _choose_tile_m(M, block_m)
    grid = (pl.cdiv(M, tm),)                               # ragged tail handled by Pallas

    out = pl.pallas_call(
        _lowrank_kernel,
        out_shape=jax.ShapeDtypeStruct((M, OUT), x.dtype),
        grid_spec=pltpu.PrefetchScalarGridSpec(
            num_scalar_prefetch=0,
            grid=grid,
            in_specs=[
                pl.BlockSpec((1, R), lambda i: (0, 0)),      # mask   (resident)
                pl.BlockSpec((tm, IN), lambda i: (i, 0)),    # x tile (pipelined)
                pl.BlockSpec((IN, R), lambda i: (0, 0)),     # V_t^T  (resident)
                pl.BlockSpec((R, OUT), lambda i: (0, 0)),    # (U*E)^T (resident)
            ],
            out_specs=pl.BlockSpec((tm, OUT), lambda i: (i, 0)),
        ),
        compiler_params=pltpu.CompilerParams(
            dimension_semantics=("parallel",),   # shards M tiles across v7x's 2 TCs
            vmem_limit_bytes=64 * 1024 * 1024,
        ),
    )(mask2, x2, vt_t_bf16, ue_t_bf16)

    return out.reshape(B, S, OUT)


# --------------------- Hypernetwork / mask computation (glue) ----------------
# TODO(synk): the bidirectional GRU is an inherently sequential, scalar-heavy
# recurrence over R=32 steps; it stays in plain JAX (lax.scan) — only the
# matmul hot path runs in Pallas.

def _gru_direction(x_seq, W_ih, W_hh, b_ih, b_hh):
    """Single-direction PyTorch-style GRU over (T, I) -> (T, H)."""
    H = W_hh.shape[1]

    def step(h, x):
        gi = x @ W_ih.T + b_ih        # (3H,)
        gh = h @ W_hh.T + b_hh        # (3H,)
        i_r, i_z, i_n = jnp.split(gi, 3)
        h_r, h_z, h_n = jnp.split(gh, 3)
        r = jax.nn.sigmoid(i_r + h_r)
        z = jax.nn.sigmoid(i_z + h_z)
        n = jnp.tanh(i_n + r * h_n)
        h_new = (1.0 - z) * n + z * h
        return h_new, h_new

    h0 = jnp.zeros((H,), x_seq.dtype)
    _, hs = lax.scan(step, h0, x_seq)
    return hs


def hypernetwork_forward(params):
    """Reproduces Hypernetwork.forward(): returns logits of shape (num_singular_values,)."""
    z = params["z"][0]                                     # (R, I)
    fwd = _gru_direction(z, params["W_ih_f"], params["W_hh_f"],
                         params["b_ih_f"], params["b_hh_f"])
    bwd = _gru_direction(z[::-1], params["W_ih_b"], params["W_hh_b"],
                         params["b_ih_b"], params["b_hh_b"])[::-1]
    out = jnp.concatenate([fwd, bwd], axis=-1)             # (R, 2H)
    # LayerNorm(2H), eps=1e-5 (PyTorch default)
    mean = out.mean(-1, keepdims=True)
    var = ((out - mean) ** 2).mean(-1, keepdims=True)
    out = (out - mean) / jnp.sqrt(var + 1e-5)
    out = out * params["ln_gamma"] + params["ln_beta"]
    out = jax.nn.gelu(out, approximate=False)              # nn.GELU() exact
    out = out @ params["lin_w"].T + params["lin_b"]        # (R, 1)
    return out[:, 0]                                       # (R,)


def gumbel_sigmoid(key, logits, tau=0.4, eps=1e-20):
    U = jax.random.uniform(key, logits.shape, dtype=logits.dtype)
    g = -jnp.log(-jnp.log(U + eps) + eps)
    return jax.nn.sigmoid((logits + g) / tau)


def calculate_eval_mask(params, key, b=3.0, tau=0.4):
    """Eval-mode calculate_mask(): gumbel-sigmoid + STE, then top-k packed mask.

    NOTE: mirrors the reference eval branch (Gumbel noise before the 0.5
    threshold, then the first-k ranks kept); flagged in review, kept as-is.
    """
    logit_mask = hypernetwork_forward(params) + b
    y_soft = gumbel_sigmoid(key, logit_mask, tau=tau)
    ste_mask = (y_soft > 0.5).astype(jnp.float32)          # STE.forward
    hard = ste_mask > 0.5
    k = jnp.sum(hard.astype(jnp.int32))
    topk_mask = (jnp.arange(hard.shape[0]) < k).astype(jnp.float32)
    return topk_mask


# ----------------------------- parameter setup --------------------------------

def init_params(key, in_features, out_features, gru_input=32, gru_hidden=64):
    rank = min(in_features, out_features)
    keys = jax.random.split(key, 16)

    # "SVD" of a deterministic random weight -> UE = U*E, V_t = V^T
    weight = jax.random.normal(keys[0], (out_features, in_features),
                               dtype=jnp.float32) * 0.05
    U, S, Vh = jnp.linalg.svd(weight, full_matrices=False)  # rank = min(out,in)
    UE = U * S[None, :]                                     # (out, rank)
    V_t = Vh                                                # (rank, in)

    def rn(k, shape, scale=0.1):
        return jax.random.normal(k, shape, dtype=jnp.float32) * scale

    H, I = gru_hidden, gru_input
    params = {
        "UE": UE.astype(jnp.float32),
        "V_t": V_t.astype(jnp.float32),
        # One-time (static) pre-transpose + bf16 cast of the kernel operands:
        "V_t_T_bf16": jnp.asarray(V_t.T, dtype=jnp.bfloat16),   # (in,  rank)
        "UE_T_bf16": jnp.asarray(UE.T, dtype=jnp.bfloat16),     # (rank, out)
        "z": jax.random.normal(keys[1], (1, rank, I), dtype=jnp.float32),
        "W_ih_f": rn(keys[2], (3 * H, I)), "W_hh_f": rn(keys[3], (3 * H, H)),
        "b_ih_f": rn(keys[4], (3 * H,)),   "b_hh_f": rn(keys[5], (3 * H,)),
        "W_ih_b": rn(keys[6], (3 * H, I)), "W_hh_b": rn(keys[7], (3 * H, H)),
        "b_ih_b": rn(keys[8], (3 * H,)),   "b_hh_b": rn(keys[9], (3 * H,)),
        "ln_gamma": jnp.ones((2 * H,), jnp.float32),
        "ln_beta": jnp.zeros((2 * H,), jnp.float32),
        "lin_w": rn(keys[10], (1, 2 * H)), "lin_b": rn(keys[11], (1,)),
    }
    return params, rank


# ----------------------------------- main -------------------------------------

if __name__ == "__main__":
    B, S, IN, OUT = 2, 8, 32, 48
    key = jax.random.PRNGKey(0)
    k_param, k_x, k_gumbel = jax.random.split(key, 3)

    params, rank = init_params(k_param, IN, OUT)
    x = jax.random.normal(k_x, (B, S, IN), dtype=jnp.float32)

    # Glue: eval-mode mask from the Hypernetwork (fixed key -> deterministic here).
    mask = calculate_eval_mask(params, k_gumbel, b=3.0, tau=0.4)   # (rank,)

    out = lowrank_linear_forward(x, params["V_t_T_bf16"], params["UE_T_bf16"], mask)
    out = jax.block_until_ready(out)

    # Reference check in plain f32 JAX (same math as the PyTorch forward).
    # Kernel runs bf16 operands / f32 MXU accumulation, so use a bf16 tolerance.
    xt = jnp.transpose(x, (0, 2, 1))                                # (B, IN, S)
    ref = (params["UE"] * mask[None, :]) @ (params["V_t"] @ xt)     # (B, OUT, S)
    ref = jnp.transpose(ref, (0, 2, 1))
    assert out.shape == (B, S, OUT)
    assert out.dtype == x.dtype
    assert jnp.allclose(out, ref, atol=2e-2, rtol=2e-2), \
        f"max abs diff {jnp.max(jnp.abs(out - ref))}"

    print("KERNEL_OK")
</pallas_src>

<mosaic_0001>
module attributes {stable_mosaic.version = 11 : i64} {
  func.func @_lowrank_kernel(%arg0: i32, %arg1: memref<1x32xf32, #tpu.memory_space<vmem>>, %arg2: memref<16x32xf32, #tpu.memory_space<vmem>>, %arg3: memref<32x32xbf16, #tpu.memory_space<vmem>>, %arg4: memref<32x48xbf16, #tpu.memory_space<vmem>>, %arg5: memref<16x48xf32, #tpu.memory_space<vmem>>) attributes {dimension_semantics = [#tpu.dimension_semantics<parallel>], iteration_bounds = array<i64: 1>, scalar_prefetch = 0 : i64, scratch_operands = 0 : i64, tpu.core_type = #tpu.core_type<tc>, window_params = [{pipeline_mode = #tpu.pipeline_mode<synchronous>, transform_indices = @transform_0, window_bounds = array<i64: 1, 32>}, {transform_indices = @transform_1, window_bounds = array<i64: 16, 32>}, {pipeline_mode = #tpu.pipeline_mode<synchronous>, transform_indices = @transform_2, window_bounds = array<i64: 32, 32>}, {pipeline_mode = #tpu.pipeline_mode<synchronous>, transform_indices = @transform_3, window_bounds = array<i64: 32, 48>}, {transform_indices = @transform_4, window_bounds = array<i64: 16, 48>}]} {
    %c0 = arith.constant 0 : index
    %c0_0 = arith.constant 0 : index
    %0 = vector.load %arg2[%c0, %c0_0] : memref<16x32xf32, #tpu.memory_space<vmem>>, vector<16x32xf32>
    %1 = arith.truncf %0 : vector<16x32xf32> to vector<16x32xbf16>
    %c0_1 = arith.constant 0 : index
    %c0_2 = arith.constant 0 : index
    %2 = vector.load %arg3[%c0_1, %c0_2] : memref<32x32xbf16, #tpu.memory_space<vmem>>, vector<32x32xbf16>
    %cst = arith.constant dense<0.000000e+00> : vector<16x32xf32>
    %3 = tpu.matmul %1, %2, %cst {dimension_numbers = #tpu.dot_dimension_numbers<[1], [0], [0], [1], [0, 0, 1, 1], [], []>} : vector<16x32xbf16>, vector<32x32xbf16>, vector<16x32xf32> -> vector<16x32xf32>
    %c0_3 = arith.constant 0 : index
    %c0_4 = arith.constant 0 : index
    %4 = vector.load %arg1[%c0_3, %c0_4] : memref<1x32xf32, #tpu.memory_space<vmem>>, vector<1x32xf32>
    %5 = vector.broadcast %4 : vector<1x32xf32> to vector<16x32xf32>
    %6 = arith.mulf %3, %5 : vector<16x32xf32>
    %7 = arith.truncf %6 : vector<16x32xf32> to vector<16x32xbf16>
    %c0_5 = arith.constant 0 : index
    %c0_6 = arith.constant 0 : index
    %8 = vector.load %arg4[%c0_5, %c0_6] : memref<32x48xbf16, #tpu.memory_space<vmem>>, vector<32x48xbf16>
    %cst_7 = arith.constant dense<0.000000e+00> : vector<16x48xf32>
    %9 = tpu.matmul %7, %8, %cst_7 {dimension_numbers = #tpu.dot_dimension_numbers<[1], [0], [0], [1], [0, 0, 1, 1], [], []>} : vector<16x32xbf16>, vector<32x48xbf16>, vector<16x48xf32> -> vector<16x48xf32>
    %c0_8 = arith.constant 0 : index
    %c0_9 = arith.constant 0 : index
    %10 = vector.load %arg5[%c0_8, %c0_9] : memref<16x48xf32, #tpu.memory_space<vmem>>, vector<16x48xf32>
    tpu.vector_store %arg5[%c0_8, %c0_9], %9 {strides = array<i32>} : memref<16x48xf32, #tpu.memory_space<vmem>>, vector<16x48xf32>,
    return
  }
  func.func @transform_0(%arg0: i32) -> (i32, i32) {
    %c0_i32 = arith.constant 0 : i32
    %c0_i32_0 = arith.constant 0 : i32
    %c0_i32_1 = arith.constant 0 : i32
    return %c0_i32, %c0_i32_0 : i32, i32
  }
  func.func @transform_1(%arg0: i32) -> (i32, i32) {
    %c0_i32 = arith.constant 0 : i32
    %c0_i32_0 = arith.constant 0 : i32
    return %arg0, %c0_i32 : i32, i32
  }
  func.func @transform_2(%arg0: i32) -> (i32, i32) {
    %c0_i32 = arith.constant 0 : i32
    %c0_i32_0 = arith.constant 0 : i32
    %c0_i32_1 = arith.constant 0 : i32
    return %c0_i32, %c0_i32_0 : i32, i32
  }
  func.func @transform_3(%arg0: i32) -> (i32, i32) {
    %c0_i32 = arith.constant 0 : i32
    %c0_i32_0 = arith.constant 0 : i32
    %c0_i32_1 = arith.constant 0 : i32
    return %c0_i32, %c0_i32_0 : i32, i32
  }
  func.func @transform_4(%arg0: i32) -> (i32, i32) {
    %c0_i32 = arith.constant 0 : i32
    %c0_i32_0 = arith.constant 0 : i32
    return %arg0, %c0_i32 : i32, i32
  }
}

</mosaic_0001>

<llo_original>
// kernel: tpu_custom_call.1
$region0: #{tpu_custom_call.1}
  #allocation0 [shape = 'u32[]', space=smem, size = 0x4, offset = 0x4, fixed_abs, tag = 'smem constant byte address 0x4 - core index']
  #allocation1 [shape = 'u32[144,128]{1,0:T(1,128)}', space=vmem, size = 0x12000, scoped, tag = 'internal scratch']
  %s0 = inlined_call_operand.hbm [shape: f32[1,32], index: 0, kind: input, shape index: {}]
  %s1 = inlined_call_operand.hbm [shape: f32[16,32], index: 1, kind: input, shape index: {}]
  %s2 = inlined_call_operand.hbm [shape: bf16[32,32], index: 2, kind: input, shape index: {}]
  %s3 = inlined_call_operand.hbm [shape: bf16[32,48], index: 3, kind: input, shape index: {}]
  %s4 = inlined_call_operand.hbm [shape: f32[16,48], index: 4, kind: output, shape index: {}]
  %s5 = sld [smem:[#allocation0]]
  $region42: #{tpu_custom_call.1} parent=0
    _
  %s7 = ssub.s32 1, %s5
  %s8 = scalar_select 0, %s7, %s5
  $region1: #{tpu_custom_call.1} parent=0
    #allocation2 [shape = 'u8[512]{0}', space=vmem, size = 0x400, scoped, tag = 'input window, operand 0, single buffered']
    #allocation3 [shape = 's32[1]{0}', space=sflag, size = 0x4, scoped, tag = 'scoped memory for tpu_custom_call.1']
    #allocation4 [shape = 's32[1]{0}', space=sflag, size = 0x4, scoped, tag = 'scoped memory for tpu_custom_call.1']
    #allocation5 [shape = 'u8[8192]{0}', space=vmem, size = 0x2000, scoped, tag = 'input window, operand 1, single buffered']
    #allocation6 [shape = 's32[1]{0}', space=sflag, size = 0x4, scoped, tag = 'scoped memory for tpu_custom_call.1']
    #allocation7 [shape = 'u8[8192]{0}', space=vmem, size = 0x2000, scoped, tag = 'input window, operand 2, single buffered']
    #allocation8 [shape = 'u8[8192]{0}', space=vmem, size = 0x2000, scoped, tag = 'input window, operand 3, single buffered']
    #allocation9 [shape = 's32[1]{0}', space=sflag, size = 0x4, scoped, tag = 'scoped memory for tpu_custom_call.1']
    #allocation10 [shape = 'u8[8192]{0}', space=vmem, size = 0x2000, scoped, tag = 'output window, operand 0, single buffered']
    %9 = vsyncpa [#allocation3], 0
    %10 = vsyncpa [#allocation6], 0
    %11 = vsyncpa [#allocation9], 0
    %12 = vsyncpa [#allocation4], 0
    // Predicated region
    $region2: #{tpu_custom_call.1} parent=1 // pred_check
      _
    $region3: #{tpu_custom_call.1} parent=1 // pred_check_branch
      %14 = sbr.rel (0) target = $region5
    $region4: #{tpu_custom_call.1} parent=1 // pred_region
      %s16 = ssub.s32 16, 16
      %17 = vsyncadd [#allocation3], %s16
      %s19 = sshll.u32 [#allocation2], 4
      %s20 = int_to_ptr.vmem [resolvable:$true] %s19
      %22 = dma.hbm_to_vmem [thread:$0]  %s0, 16, %s20, [#allocation3]
    $region5: #{tpu_custom_call.1} parent=1 // pred_fallthru
      _
    // Predicated region
    $region6: #{tpu_custom_call.1} parent=1 // pred_check
      _
    $region7: #{tpu_custom_call.1} parent=1 // pred_check_branch
      %24 = sbr.rel (0) target = $region9
    $region8: #{tpu_custom_call.1} parent=1 // pred_region
      %s26 = ssub.s32 256, 256
      %27 = vsyncadd [#allocation6], %s26
      %s28 = sshll.u32 [#allocation5], 4
      %s29 = int_to_ptr.vmem [resolvable:$true] %s28
      %34 = dma.hbm_to_vmem [thread:$0]  %s1, 256, %s29, [#allocation6], 128, 128, 8
    $region9: #{tpu_custom_call.1} parent=1 // pred_fallthru
      _
    // Predicated region
    $region10: #{tpu_custom_call.1} parent=1 // pred_check
      _
    $region11: #{tpu_custom_call.1} parent=1 // pred_check_branch
      %36 = sbr.rel (0) target = $region13
    $region12: #{tpu_custom_call.1} parent=1 // pred_region
      %s38 = ssub.s32 256, 256
      %39 = vsyncadd [#allocation6], %s38
      %s40 = sshll.u32 [#allocation7], 4
      %s41 = int_to_ptr.vmem [resolvable:$true] %s40
      %46 = dma.hbm_to_vmem [thread:$0]  %s2, 256, %s41, [#allocation6], 64, 64, 4
    $region13: #{tpu_custom_call.1} parent=1 // pred_fallthru
      _
    // Predicated region
    $region14: #{tpu_custom_call.1} parent=1 // pred_check
      _
    $region15: #{tpu_custom_call.1} parent=1 // pred_check_branch
      %48 = sbr.rel (0) target = $region17
    $region16: #{tpu_custom_call.1} parent=1 // pred_region
      %s50 = ssub.s32 256, 256
      %51 = vsyncadd [#allocation9], %s50
      %s52 = sshll.u32 [#allocation8], 4
      %s53 = int_to_ptr.vmem [resolvable:$true] %s52
      %58 = dma.hbm_to_vmem [thread:$0]  %s3, 256, %s53, [#allocation9], 64, 64, 4
    $region17: #{tpu_custom_call.1} parent=1 // pred_fallthru
      _
    // Predicated region
    $region18: #{tpu_custom_call.1} parent=1 // pred_check
      _
    $region19: #{tpu_custom_call.1} parent=1 // pred_check_branch
      %60 = sbr.rel (0) target = $region21
    $region20: #{tpu_custom_call.1} parent=1 // pred_region
      %61 = dma.done [#allocation3], 16
    $region21: #{tpu_custom_call.1} parent=1 // pred_fallthru
      _
    // Predicated region
    $region22: #{tpu_custom_call.1} parent=1 // pred_check
      _
    $region23: #{tpu_custom_call.1} parent=1 // pred_check_branch
      %63 = sbr.rel (0) target = $region25
    $region24: #{tpu_custom_call.1} parent=1 // pred_region
      %64 = dma.done [#allocation6], 256
    $region25: #{tpu_custom_call.1} parent=1 // pred_fallthru
      _
    // Predicated region
    $region26: #{tpu_custom_call.1} parent=1 // pred_check
      _
    $region27: #{tpu_custom_call.1} parent=1 // pred_check_branch
      %66 = sbr.rel (0) target = $region29
    $region28: #{tpu_custom_call.1} parent=1 // pred_region
      %67 = dma.done [#allocation6], 256
    $region29: #{tpu_custom_call.1} parent=1 // pred_fallthru
      _
    // Predicated region
    $region30: #{tpu_custom_call.1} parent=1 // pred_check
      _
    $region31: #{tpu_custom_call.1} parent=1 // pred_check_branch
      %69 = sbr.rel (0) target = $region33
    $region32: #{tpu_custom_call.1} parent=1 // pred_region
      %70 = dma.done [#allocation9], 256
    $region33: #{tpu_custom_call.1} parent=1 // pred_fallthru
      _
    %v72 = vld [vmem:[#allocation5] sm:$0xff]
    %v73 = vld [vmem:[#allocation5 + $0x8] sm:$0xff]
    %v74 = vpack.c.bf16 %v73, %v72
    %v75 = vld [vmem:[#allocation7] sm:$0xf]
    %v76 = vld [vmem:[#allocation7 + $0x4] sm:$0xf]
    %v77 = vld [vmem:[#allocation7 + $0x8] sm:$0xf]
    %v78 = vld [vmem:[#allocation7 + $0xc] sm:$0xf]
    %v83 = vunpack.c.l.b16 %v75
    %v84 = vunpack.c.l.b16 %v76
    %v85 = vunpack.c.l.b16 %v77
    %v86 = vunpack.c.l.b16 %v78
    %v87 = vpack.c.b16 %v84, %v83
    %v88 = vpack.c.b16 %v86, %v85
    %vm91 = vcmask 261120
    %v93 = vsel %vm91, %v74, 0
    %95 = vmatprep.subr.bf16.mxu0 0
    %96 = vmatpush1.bf16.msra.mxu0 %v87
    %97 = vmatprep.subr.bf16.mxu0 0
    %98 = vmatpush1.bf16.msra.mxu0 %v88
    %99 = vmatprep.subr.bf16.mxu0 0
    %100 = vmatpush1.bf16.msra.mxu0 0
    %101 = vmatprep.subr.bf16.mxu0 0
    %102 = vmatpush1.bf16.msra.mxu0 0
    %103 = vmatprep.subr.bf16.mxu0 0
    %104 = vmatpush1.bf16.msra.mxu0 0
    %105 = vmatprep.subr.bf16.mxu0 0
    %106 = vmatpush1.bf16.msra.mxu0 0
    %107 = vmatprep.subr.bf16.mxu0 0
    %108 = vmatpush1.bf16.msra.mxu0 0
    %109 = vmatprep.subr.bf16.mxu0 0
    %110 = vmatpush1.bf16.msra.mxu0 0
    %111 = vmatprep.subr.bf16.mxu0 0
    %112 = vmatpush1.bf16.msra.mxu0 0
    %113 = vmatprep.subr.bf16.mxu0 0
    %114 = vmatpush1.bf16.msra.mxu0 0
    %115 = vmatprep.subr.bf16.mxu0 0
    %116 = vmatpush1.bf16.msra.mxu0 0
    %117 = vmatprep.subr.bf16.mxu0 0
    %118 = vmatpush1.bf16.msra.mxu0 0
    %119 = vmatprep.subr.bf16.mxu0 0
    %120 = vmatpush1.bf16.msra.mxu0 0
    %121 = vmatprep.subr.bf16.mxu0 0
    %122 = vmatpush1.bf16.msra.mxu0 0
    %123 = vmatprep.subr.bf16.mxu0 0
    %124 = vmatpush1.bf16.msra.mxu0 0
    %125 = vmatprep.subr.bf16.mxu0 0
    %126 = vmatpush1.bf16.msra.mxu0 0
    %127 = vmatprep.mubr.bf16.mxu0 0
    %128 = vmatmul.mubr.bf16.gmra.mrb[0].mxu0 %v93
    %v129 = vpop.f32.mrb[0].mxu0
    %v130 = vadd.f32 0.0, %v129
    %v131 = vpop.f32.mrb[0].mxu0
    %v132 = vpop.f32.mrb[0].mxu0
    %v133 = vadd.f32 0.0, %v132
    %v134 = vpop.f32.mrb[0].mxu0
    %135 = vdwg.mxu0
    %v136 = vld [vmem:[#allocation2] sm:$0x1]
    %v138 = vlaneseq
    %v139 = vshrl.u32 %v138, 7
    %v140 = vsub.s32 0, %v139
    %v141 = vrot.slane %v136, %v140
    %v143 = vmul.f32 %v130, %v141
    %v144 = vmul.f32 %v133, %v141
    %v145 = vpack.c.bf16 %v144, %v143
    %v146 = vld [vmem:[#allocation8] sm:$0xf]
    %v147 = vld [vmem:[#allocation8 + $0x4] sm:$0xf]
    %v148 = vld [vmem:[#allocation8 + $0x8] sm:$0xf]
    %v149 = vld [vmem:[#allocation8 + $0xc] sm:$0xf]
    %v154 = vunpack.c.l.b16 %v146
    %v155 = vunpack.c.l.b16 %v147
    %v156 = vunpack.c.l.b16 %v148
    %v157 = vunpack.c.l.b16 %v149
    %v158 = vpack.c.b16 %v155, %v154
    %v159 = vpack.c.b16 %v157, %v156
    %v163 = vsel %vm91, %v145, 0
    %165 = vmatprep.subr.bf16.mxu0 0
    %166 = vmatpush1.bf16.msra.mxu0 %v158
    %167 = vmatprep.subr.bf16.mxu0 0
    %168 = vmatpush1.bf16.msra.mxu0 %v159
    %169 = vmatprep.subr.bf16.mxu0 0
    %170 = vmatpush1.bf16.msra.mxu0 0
    %171 = vmatprep.subr.bf16.mxu0 0
    %172 = vmatpush1.bf16.msra.mxu0 0
    %173 = vmatprep.subr.bf16.mxu0 0
    %174 = vmatpush1.bf16.msra.mxu0 0
    %175 = vmatprep.subr.bf16.mxu0 0
    %176 = vmatpush1.bf16.msra.mxu0 0
    %177 = vmatprep.subr.bf16.mxu0 0
    %178 = vmatpush1.bf16.msra.mxu0 0
    %179 = vmatprep.subr.bf16.mxu0 0
    %180 = vmatpush1.bf16.msra.mxu0 0
    %181 = vmatprep.subr.bf16.mxu0 0
    %182 = vmatpush1.bf16.msra.mxu0 0
    %183 = vmatprep.subr.bf16.mxu0 0
    %184 = vmatpush1.bf16.msra.mxu0 0
    %185 = vmatprep.subr.bf16.mxu0 0
    %186 = vmatpush1.bf16.msra.mxu0 0
    %187 = vmatprep.subr.bf16.mxu0 0
    %188 = vmatpush1.bf16.msra.mxu0 0
    %189 = vmatprep.subr.bf16.mxu0 0
    %190 = vmatpush1.bf16.msra.mxu0 0
    %191 = vmatprep.subr.bf16.mxu0 0
    %192 = vmatpush1.bf16.msra.mxu0 0
    %193 = vmatprep.subr.bf16.mxu0 0
    %194 = vmatpush1.bf16.msra.mxu0 0
    %195 = vmatprep.subr.bf16.mxu0 0
    %196 = vmatpush1.bf16.msra.mxu0 0
    %197 = vmatprep.mubr.bf16.mxu0 0
    %198 = vmatmul.mubr.bf16.gmra.mrb[0].mxu0 %v163
    %v199 = vpop.f32.mrb[0].mxu0
    %v200 = vadd.f32 0.0, %v199
    %v201 = vpop.f32.mrb[0].mxu0
    %v202 = vpop.f32.mrb[0].mxu0
    %v203 = vadd.f32 0.0, %v202
    %v204 = vpop.f32.mrb[0].mxu0
    %205 = vdwg.mxu0
    %vm206 = vcmask 392192
    %207 = vst.msk [vmem:[#allocation10] sm:$0xff] %vm206, %v200
    %208 = vst.msk [vmem:[#allocation10 + $0x8] sm:$0xff] %vm206, %v203
    // Predicated region
    $region34: #{tpu_custom_call.1} parent=1 // pred_check
      _
    $region35: #{tpu_custom_call.1} parent=1 // pred_check_branch
      %210 = sbr.rel (0) target = $region37
    $region36: #{tpu_custom_call.1} parent=1 // pred_region
      %s212 = ssub.s32 256, 256
      %213 = vsyncadd [#allocation4], %s212
      %s214 = sshll.u32 [#allocation10], 4
      %s215 = int_to_ptr.vmem [resolvable:$true] %s214
      %220 = dma.vmem_to_hbm [thread:$0]  %s215, 256, %s4, [#allocation4], 128, 128, 8
    $region37: #{tpu_custom_call.1} parent=1 // pred_fallthru
      _
    // Predicated region
    $region38: #{tpu_custom_call.1} parent=1 // pred_check
      _
    $region39: #{tpu_custom_call.1} parent=1 // pred_check_branch
      %222 = sbr.rel (0) target = $region41
    $region40: #{tpu_custom_call.1} parent=1 // pred_region
      %223 = dma.done [#allocation4], 256
    $region41: #{tpu_custom_call.1} parent=1 // pred_fallthru
      _
    %224 = vsyncpa [#allocation3], 1
    %225 = vsyncpa [#allocation6], 1
    %226 = vsyncpa [#allocation9], 1
    %227 = vsyncpa [#allocation4], 1

</llo_original>
